<compile_context>
chip_gen: v5e
topology: v5e:2x2
jax: 0.10.0
libtpu: 0.0.40
codegen_flags: <defaults>
</compile_context>

<pallas_src>
import jax
import jax.numpy as jnp
from jax.experimental import pallas as pl
from jax.experimental.pallas import tpu as pltpu

NEURONS = 8

# Column offsets inside the packed (8, 32) parameter array.
_W1_OFF, _W2_OFF, _W3_OFF = 0, 8, 16
_W0_COL, _B0_COL = 24, 25
_B1_COL, _B2_COL, _B3_COL = 26, 27, 28
_W4_COL, _B4_COL = 29, 30
_PACK_COLS = 32


def mlp_kernel(wp_ref, x_ref, o_ref):
    x = x_ref[...]                                    # (1, tile_n)

    # Layer 0: Linear(1, 8).  K == 1 -> VPU broadcast multiply-add.
    w0 = wp_ref[:, _W0_COL:_W0_COL + 1]               # (8, 1)
    b0 = wp_ref[:, _B0_COL:_B0_COL + 1]               # (8, 1)
    h = w0 * x + b0                                   # (8, tile_n)

    # Hidden layers: 3 x [Linear(8, 8) -> Tanh] on the MXU + EUP.
    for w_off, b_col in ((_W1_OFF, _B1_COL),
                         (_W2_OFF, _B2_COL),
                         (_W3_OFF, _B3_COL)):
        w = wp_ref[:, w_off:w_off + NEURONS]          # (8, 8) (out, in)
        b = wp_ref[:, b_col:b_col + 1]                # (8, 1)
        h = jnp.tanh(jnp.dot(w, h, preferred_element_type=jnp.float32) + b)

    # Output layer: Linear(8, 1).  Single output row -> weighted sublane sum
    # (VPU mul + XLU reduce) instead of a 1-wide MXU pass.
    w4 = wp_ref[:, _W4_COL:_W4_COL + 1]               # (8, 1)
    b4 = wp_ref[0:1, _B4_COL:_B4_COL + 1]             # (1, 1)
    y = jnp.sum(w4 * h, axis=0, keepdims=True) + b4   # (1, tile_n)
    o_ref[...] = y.astype(o_ref.dtype)


def _round_up(a, b):
    return ((a + b - 1) // b) * b


def pack_params(params):
    """Packs the (in, out)-layout params into one (8, 32) f32 array holding
    the transposed (out, in) weights + biases used by the kernel."""
    (w0, b0), (w1, b1), (w2, b2), (w3, b3), (w4, b4) = params
    wp = jnp.zeros((NEURONS, _PACK_COLS), jnp.float32)
    wp = wp.at[:, _W1_OFF:_W1_OFF + NEURONS].set(w1.T)
    wp = wp.at[:, _W2_OFF:_W2_OFF + NEURONS].set(w2.T)
    wp = wp.at[:, _W3_OFF:_W3_OFF + NEURONS].set(w3.T)
    wp = wp.at[:, _W0_COL:_W0_COL + 1].set(w0.T)            # (8, 1)
    wp = wp.at[:, _B0_COL:_B0_COL + 1].set(b0.T)
    wp = wp.at[:, _B1_COL:_B1_COL + 1].set(b1.T)
    wp = wp.at[:, _B2_COL:_B2_COL + 1].set(b2.T)
    wp = wp.at[:, _B3_COL:_B3_COL + 1].set(b3.T)
    wp = wp.at[:, _W4_COL:_W4_COL + 1].set(w4)               # already (8, 1)
    wp = wp.at[:, _B4_COL:_B4_COL + 1].set(jnp.full((NEURONS, 1), b4[0, 0]))
    return wp


def neural_net_forward(x, params, *, tile_n=8192):
    """Applies the MLP to x.view(-1, 1); returns (N, 1) float32."""
    xf = jnp.reshape(x, (1, -1)).astype(jnp.float32)   # batch on the lane axis
    n = xf.shape[1]

    tile_n = _round_up(int(tile_n), 128)
    tile = min(tile_n, _round_up(n, 128))              # lane-aligned tile
    num_tiles = pl.cdiv(n, tile)
    n_pad = num_tiles * tile
    xp = jnp.pad(xf, ((0, 0), (0, n_pad - n)))          # arbitrary N supported

    wpack = pack_params(params)

    out = pl.pallas_call(
        mlp_kernel,
        out_shape=jax.ShapeDtypeStruct((1, n_pad), jnp.float32),
        grid=(num_tiles,),
        in_specs=[
            # Packed params: one tiny resident block (same index every step).
            pl.BlockSpec((NEURONS, _PACK_COLS), lambda i: (0, 0)),
            # Input samples, lane-dense.
            pl.BlockSpec((1, tile), lambda i: (0, i)),
        ],
        out_specs=pl.BlockSpec((1, tile), lambda i: (0, i)),
        compiler_params=pltpu.CompilerParams(
            dimension_semantics=("parallel",)),
    )(wpack, xp)

    return out[0, :n].reshape(-1, 1)


def init_params(key, ni=1, nl=3, no=1, nneu=NEURONS):
    """Deterministic params matching PyTorch Linear default init
    (uniform(-1/sqrt(fan_in), 1/sqrt(fan_in)) for weight and bias),
    stored as (fan_in, fan_out) so y = x @ W + b."""
    dims = [(ni, nneu)] + [(nneu, nneu)] * nl + [(nneu, no)]
    params = []
    for fan_in, fan_out in dims:
        key, kw, kb = jax.random.split(key, 3)
        bound = 1.0 / float(jnp.sqrt(jnp.float32(fan_in)))
        w = jax.random.uniform(kw, (fan_in, fan_out), jnp.float32,
                               -bound, bound)
        b = jax.random.uniform(kb, (1, fan_out), jnp.float32, -bound, bound)
        params.append((w, b))
    return params


def reference_forward(x, params):
    h = jnp.reshape(x, (-1, 1)).astype(jnp.float32)
    (w0, b0), (w1, b1), (w2, b2), (w3, b3), (w4, b4) = params
    h = h @ w0 + b0
    h = jnp.tanh(h @ w1 + b1)
    h = jnp.tanh(h @ w2 + b2)
    h = jnp.tanh(h @ w3 + b3)
    return h @ w4 + b4


if __name__ == "__main__":
    key = jax.random.PRNGKey(0)
    key, kx, kp = jax.random.split(key, 3)

    # Small deterministic input: 300 scalar samples (deliberately NOT a
    # multiple of 128 to exercise the padding path; module views it as (-1,1)).
    x = jax.random.uniform(kx, (300,), jnp.float32, 0.0, 1.0)
    params = init_params(kp)
    y_ref = reference_forward(x, params)

    # 1) Default large tile (clamps to one 384-lane block here).
    y = neural_net_forward(x, params)
    y = jax.block_until_ready(y)
    assert y.shape == (300, 1)
    assert jnp.allclose(y, y_ref, atol=1e-5, rtol=1e-5)

    # 2) Small tile forcing a multi-step grid (exercises resident weights +
    #    pipelined input/output blocks).
    y2 = neural_net_forward(x, params, tile_n=128)
    y2 = jax.block_until_ready(y2)
    assert y2.shape == (300, 1)
    assert jnp.allclose(y2, y_ref, atol=1e-5, rtol=1e-5)

    print("KERNEL_OK")
</pallas_src>

<mosaic_0001>
module attributes {stable_mosaic.version = 11 : i64} {
  func.func @mlp_kernel(%arg0: i32, %arg1: memref<8x32xf32, #tpu.memory_space<vmem>>, %arg2: memref<1x384xf32, #tpu.memory_space<vmem>>, %arg3: memref<1x384xf32, #tpu.memory_space<vmem>>) attributes {dimension_semantics = [#tpu.dimension_semantics<parallel>], iteration_bounds = array<i64: 1>, scalar_prefetch = 0 : i64, scratch_operands = 0 : i64, tpu.core_type = #tpu.core_type<tc>, window_params = [{pipeline_mode = #tpu.pipeline_mode<synchronous>, transform_indices = @transform_0, window_bounds = array<i64: 8, 32>}, {transform_indices = @transform_1, window_bounds = array<i64: 1, 384>}, {transform_indices = @transform_2, window_bounds = array<i64: 1, 384>}]} {
    %c0 = arith.constant 0 : index
    %c0_0 = arith.constant 0 : index
    %0 = vector.load %arg2[%c0, %c0_0] : memref<1x384xf32, #tpu.memory_space<vmem>>, vector<1x384xf32>
    %c0_1 = arith.constant 0 : index
    %c24 = arith.constant 24 : index
    %1 = vector.load %arg1[%c0_1, %c24] : memref<8x32xf32, #tpu.memory_space<vmem>>, vector<8x1xf32>
    %c0_2 = arith.constant 0 : index
    %c25 = arith.constant 25 : index
    %2 = vector.load %arg1[%c0_2, %c25] : memref<8x32xf32, #tpu.memory_space<vmem>>, vector<8x1xf32>
    %3 = vector.broadcast %1 : vector<8x1xf32> to vector<8x384xf32>
    %4 = vector.broadcast %0 : vector<1x384xf32> to vector<8x384xf32>
    %5 = arith.mulf %3, %4 : vector<8x384xf32>
    %6 = vector.broadcast %2 : vector<8x1xf32> to vector<8x384xf32>
    %7 = arith.addf %5, %6 : vector<8x384xf32>
    %c0_3 = arith.constant 0 : index
    %c0_4 = arith.constant 0 : index
    %8 = vector.load %arg1[%c0_3, %c0_4] : memref<8x32xf32, #tpu.memory_space<vmem>>, vector<8x8xf32>
    %c0_5 = arith.constant 0 : index
    %c26 = arith.constant 26 : index
    %9 = vector.load %arg1[%c0_5, %c26] : memref<8x32xf32, #tpu.memory_space<vmem>>, vector<8x1xf32>
    %cst = arith.constant dense<0.000000e+00> : vector<8x384xf32>
    %10 = tpu.matmul %8, %7, %cst {dimension_numbers = #tpu.dot_dimension_numbers<[1], [0], [0], [1], [0, 0, 1, 1], [], []>} : vector<8x8xf32>, vector<8x384xf32>, vector<8x384xf32> -> vector<8x384xf32>
    %11 = vector.broadcast %9 : vector<8x1xf32> to vector<8x384xf32>
    %12 = arith.addf %10, %11 : vector<8x384xf32>
    %13 = math.tanh %12 : vector<8x384xf32>
    %c0_6 = arith.constant 0 : index
    %c8 = arith.constant 8 : index
    %14 = vector.load %arg1[%c0_6, %c8] : memref<8x32xf32, #tpu.memory_space<vmem>>, vector<8x8xf32>
    %c0_7 = arith.constant 0 : index
    %c27 = arith.constant 27 : index
    %15 = vector.load %arg1[%c0_7, %c27] : memref<8x32xf32, #tpu.memory_space<vmem>>, vector<8x1xf32>
    %cst_8 = arith.constant dense<0.000000e+00> : vector<8x384xf32>
    %16 = tpu.matmul %14, %13, %cst_8 {dimension_numbers = #tpu.dot_dimension_numbers<[1], [0], [0], [1], [0, 0, 1, 1], [], []>} : vector<8x8xf32>, vector<8x384xf32>, vector<8x384xf32> -> vector<8x384xf32>
    %17 = vector.broadcast %15 : vector<8x1xf32> to vector<8x384xf32>
    %18 = arith.addf %16, %17 : vector<8x384xf32>
    %19 = math.tanh %18 : vector<8x384xf32>
    %c0_9 = arith.constant 0 : index
    %c16 = arith.constant 16 : index
    %20 = vector.load %arg1[%c0_9, %c16] : memref<8x32xf32, #tpu.memory_space<vmem>>, vector<8x8xf32>
    %c0_10 = arith.constant 0 : index
    %c28 = arith.constant 28 : index
    %21 = vector.load %arg1[%c0_10, %c28] : memref<8x32xf32, #tpu.memory_space<vmem>>, vector<8x1xf32>
    %cst_11 = arith.constant dense<0.000000e+00> : vector<8x384xf32>
    %22 = tpu.matmul %20, %19, %cst_11 {dimension_numbers = #tpu.dot_dimension_numbers<[1], [0], [0], [1], [0, 0, 1, 1], [], []>} : vector<8x8xf32>, vector<8x384xf32>, vector<8x384xf32> -> vector<8x384xf32>
    %23 = vector.broadcast %21 : vector<8x1xf32> to vector<8x384xf32>
    %24 = arith.addf %22, %23 : vector<8x384xf32>
    %25 = math.tanh %24 : vector<8x384xf32>
    %c0_12 = arith.constant 0 : index
    %c29 = arith.constant 29 : index
    %26 = vector.load %arg1[%c0_12, %c29] : memref<8x32xf32, #tpu.memory_space<vmem>>, vector<8x1xf32>
    %c0_13 = arith.constant 0 : index
    %c30 = arith.constant 30 : index
    %27 = vector.load %arg1[%c0_13, %c30] : memref<8x32xf32, #tpu.memory_space<vmem>>, vector<1x1xf32>
    %28 = vector.broadcast %26 : vector<8x1xf32> to vector<8x384xf32>
    %29 = arith.mulf %28, %25 : vector<8x384xf32>
    %cst_14 = arith.constant dense<0.000000e+00> : vector<384xf32>
    %30 = vector.multi_reduction <add>, %29, %cst_14 [0] : vector<8x384xf32> to vector<384xf32>
    %31 = vector.shape_cast %30 : vector<384xf32> to vector<1x384xf32>
    %32 = vector.broadcast %27 : vector<1x1xf32> to vector<1x384xf32>
    %33 = arith.addf %31, %32 : vector<1x384xf32>
    %c0_15 = arith.constant 0 : index
    %c0_16 = arith.constant 0 : index
    %34 = vector.load %arg3[%c0_15, %c0_16] : memref<1x384xf32, #tpu.memory_space<vmem>>, vector<1x384xf32>
    tpu.vector_store %arg3[%c0_15, %c0_16], %33 {strides = array<i32>} : memref<1x384xf32, #tpu.memory_space<vmem>>, vector<1x384xf32>,
    return
  }
  func.func @transform_0(%arg0: i32) -> (i32, i32) {
    %c0_i32 = arith.constant 0 : i32
    %c0_i32_0 = arith.constant 0 : i32
    %c0_i32_1 = arith.constant 0 : i32
    return %c0_i32, %c0_i32_0 : i32, i32
  }
  func.func @transform_1(%arg0: i32) -> (i32, i32) {
    %c0_i32 = arith.constant 0 : i32
    %c0_i32_0 = arith.constant 0 : i32
    return %c0_i32, %arg0 : i32, i32
  }
  func.func @transform_2(%arg0: i32) -> (i32, i32) {
    %c0_i32 = arith.constant 0 : i32
    %c0_i32_0 = arith.constant 0 : i32
    return %c0_i32, %arg0 : i32, i32
  }
}

</mosaic_0001>

<llo_original>
// kernel: tpu_custom_call.1
$region0: #{tpu_custom_call.1}
  #allocation0 [shape = 'u32[]', space=smem, size = 0x4, offset = 0x4, fixed_abs, tag = 'smem constant byte address 0x4 - core index']
  #allocation1 [shape = 'u32[72,128]{1,0:T(1,128)}', space=vmem, size = 0x9000, scoped, tag = 'internal scratch']
  %s0 = inlined_call_operand.hbm [shape: f32[8,32], index: 0, kind: input, shape index: {}]
  %s1 = inlined_call_operand.hbm [shape: f32[1,384], index: 1, kind: input, shape index: {}]
  %s2 = inlined_call_operand.hbm [shape: f32[1,384], index: 2, kind: output, shape index: {}]
  %s3 = sld [smem:[#allocation0]]
  $region26: #{tpu_custom_call.1} parent=0
    _
  %s5 = ssub.s32 1, %s3
  %s6 = scalar_select 0, %s5, %s3
  $region1: #{tpu_custom_call.1} parent=0
    #allocation2 [shape = 'u8[4096]{0}', space=vmem, size = 0x1000, scoped, tag = 'input window, operand 0, single buffered']
    #allocation3 [shape = 's32[1]{0}', space=sflag, size = 0x4, scoped, tag = 'scoped memory for tpu_custom_call.1']
    #allocation4 [shape = 's32[1]{0}', space=sflag, size = 0x4, scoped, tag = 'scoped memory for tpu_custom_call.1']
    #allocation5 [shape = 'u8[1536]{0}', space=vmem, size = 0x800, scoped, tag = 'input window, operand 1, single buffered']
    #allocation6 [shape = 's32[1]{0}', space=sflag, size = 0x4, scoped, tag = 'scoped memory for tpu_custom_call.1']
    #allocation7 [shape = 'u8[1536]{0}', space=vmem, size = 0x800, scoped, tag = 'output window, operand 0, single buffered']
    %7 = vsyncpa [#allocation3], 0
    %8 = vsyncpa [#allocation6], 0
    %9 = vsyncpa [#allocation4], 0
    // Predicated region
    $region2: #{tpu_custom_call.1} parent=1 // pred_check
      _
    $region3: #{tpu_custom_call.1} parent=1 // pred_check_branch
      %11 = sbr.rel (0) target = $region5
    $region4: #{tpu_custom_call.1} parent=1 // pred_region
      %13 = vsyncadd [#allocation3], 0
      %s15 = sshll.u32 %s0, 4
      %s16 = int_to_ptr.hbm [resolvable:$true] %s15
      %s17 = sshll.u32 [#allocation2], 4
      %s18 = int_to_ptr.vmem [resolvable:$true] %s17
      %20 = dma.hbm_to_vmem [thread:$0]  %s16, 128, %s18, [#allocation3]
    $region5: #{tpu_custom_call.1} parent=1 // pred_fallthru
      _
    // Predicated region
    $region6: #{tpu_custom_call.1} parent=1 // pred_check
      _
    $region7: #{tpu_custom_call.1} parent=1 // pred_check_branch
      %22 = sbr.rel (0) target = $region9
    $region8: #{tpu_custom_call.1} parent=1 // pred_region
      %24 = vsyncadd [#allocation6], 0
      %s26 = sshll.u32 %s1, 4
      %s27 = int_to_ptr.hbm [resolvable:$true] %s26
      %s28 = sshll.u32 [#allocation5], 4
      %s29 = int_to_ptr.vmem [resolvable:$true] %s28
      %31 = dma.hbm_to_vmem [thread:$0]  %s27, 48, %s29, [#allocation6]
    $region9: #{tpu_custom_call.1} parent=1 // pred_fallthru
      _
    // Predicated region
    $region10: #{tpu_custom_call.1} parent=1 // pred_check
      _
    $region11: #{tpu_custom_call.1} parent=1 // pred_check_branch
      %33 = sbr.rel (0) target = $region13
    $region12: #{tpu_custom_call.1} parent=1 // pred_region
      %35 = dma.done [#allocation3], 128
    $region13: #{tpu_custom_call.1} parent=1 // pred_fallthru
      _
    // Predicated region
    $region14: #{tpu_custom_call.1} parent=1 // pred_check
      _
    $region15: #{tpu_custom_call.1} parent=1 // pred_check_branch
      %37 = sbr.rel (0) target = $region17
    $region16: #{tpu_custom_call.1} parent=1 // pred_region
      %39 = dma.done [#allocation6], 48
    $region17: #{tpu_custom_call.1} parent=1 // pred_fallthru
      _
    %v40 = vld [vmem:[#allocation5] sm:$0x7]
    %v41 = vld [vmem:[#allocation2] sm:$0xff]
    %43 = vset.pattern.permute.xlu0 24
    %44 = vperm.xlu0 %43, %v41
    %v45 = vpop.permute.xlu0 %44
    %v48 = vperm.slane %v40, 0
    %v49 = vperm.slane %v40, 1
    %v50 = vperm.slane %v40, 2
    %v54 = vmul.f32 %v45, %v48
    %v55 = vmul.f32 %v45, %v49
    %v56 = vmul.f32 %v45, %v50
    %57 = vset.pattern.permute.xlu0 25
    %58 = vperm.xlu0 %57, %v41
    %v59 = vpop.permute.xlu0 %58
    %v61 = vadd.f32 %v54, %v59
    %v62 = vadd.f32 %v55, %v59
    %v63 = vadd.f32 %v56, %v59
    %64 = vset.pattern.permute.xlu0 26
    %65 = vperm.xlu0 %64, %v41
    %v66 = vpop.permute.xlu0 %65
    %vm68 = vcmask 64512
    %v69 = vsel %vm68, %v41, 0
    %71 = vmatpush.msra.mxu0 0.0
    %72 = vmatpush.msra.mxu0 0.0
    %73 = vmatpush.msra.mxu0 0.0
    %74 = vmatpush.msra.mxu0 0.0
    %75 = vmatpush.msra.mxu0 0.0
    %76 = vmatpush.msra.mxu0 0.0
    %77 = vmatpush.msra.mxu0 0.0
    %78 = vmatpush.msra.mxu0 0.0
    %79 = vmatpush.msra.mxu0 0.0
    %80 = vmatpush.msra.mxu0 0.0
    %81 = vmatpush.msra.mxu0 0.0
    %82 = vmatpush.msra.mxu0 0.0
    %83 = vmatpush.msra.mxu0 0.0
    %84 = vmatpush.msra.mxu0 0.0
    %85 = vmatpush.msra.mxu0 0.0
    %86 = vmatpush.msra.mxu0 %v61
    %87 = vmatmul.f32.gmra.mxu0 %v69
    %v88 = vpop.f32.mrf.mxu0
    %v89 = vadd.f32 %v66, %v88
    %90 = vdwg.mxu0
    %91 = vmatpush.msra.mxu0 0.0
    %92 = vmatpush.msra.mxu0 0.0
    %93 = vmatpush.msra.mxu0 0.0
    %94 = vmatpush.msra.mxu0 0.0
    %95 = vmatpush.msra.mxu0 0.0
    %96 = vmatpush.msra.mxu0 0.0
    %97 = vmatpush.msra.mxu0 0.0
    %98 = vmatpush.msra.mxu0 0.0
    %99 = vmatpush.msra.mxu0 0.0
    %100 = vmatpush.msra.mxu0 0.0
    %101 = vmatpush.msra.mxu0 0.0
    %102 = vmatpush.msra.mxu0 0.0
    %103 = vmatpush.msra.mxu0 0.0
    %104 = vmatpush.msra.mxu0 0.0
    %105 = vmatpush.msra.mxu0 0.0
    %106 = vmatpush.msra.mxu0 %v62
    %107 = vmatmul.f32.gmra.mxu0 %v69
    %v108 = vpop.f32.mrf.mxu0
    %v109 = vadd.f32 %v66, %v108
    %110 = vdwg.mxu0
    %111 = vmatpush.msra.mxu0 0.0
    %112 = vmatpush.msra.mxu0 0.0
    %113 = vmatpush.msra.mxu0 0.0
    %114 = vmatpush.msra.mxu0 0.0
    %115 = vmatpush.msra.mxu0 0.0
    %116 = vmatpush.msra.mxu0 0.0
    %117 = vmatpush.msra.mxu0 0.0
    %118 = vmatpush.msra.mxu0 0.0
    %119 = vmatpush.msra.mxu0 0.0
    %120 = vmatpush.msra.mxu0 0.0
    %121 = vmatpush.msra.mxu0 0.0
    %122 = vmatpush.msra.mxu0 0.0
    %123 = vmatpush.msra.mxu0 0.0
    %124 = vmatpush.msra.mxu0 0.0
    %125 = vmatpush.msra.mxu0 0.0
    %126 = vmatpush.msra.mxu0 %v63
    %127 = vmatmul.f32.gmra.mxu0 %v69
    %v128 = vpop.f32.mrf.mxu0
    %v129 = vadd.f32 %v66, %v128
    %130 = vdwg.mxu0
    %v131 = vtanh.pop %v89
    %v132 = vtanh.pop %v109
    %v133 = vtanh.pop %v129
    %134 = vset.pattern.permute.xlu0 27
    %135 = vperm.xlu0 %134, %v41
    %v136 = vpop.permute.xlu0 %135
    %138 = vrot.lane.b32.xlu0 %v41, 120
    %v139 = vpop.permute.xlu0 %138
    %v140 = vsel %vm68, %v139, 0
    %142 = vmatpush.msra.mxu0 0.0
    %143 = vmatpush.msra.mxu0 0.0
    %144 = vmatpush.msra.mxu0 0.0
    %145 = vmatpush.msra.mxu0 0.0
    %146 = vmatpush.msra.mxu0 0.0
    %147 = vmatpush.msra.mxu0 0.0
    %148 = vmatpush.msra.mxu0 0.0
    %149 = vmatpush.msra.mxu0 0.0
    %150 = vmatpush.msra.mxu0 0.0
    %151 = vmatpush.msra.mxu0 0.0
    %152 = vmatpush.msra.mxu0 0.0
    %153 = vmatpush.msra.mxu0 0.0
    %154 = vmatpush.msra.mxu0 0.0
    %155 = vmatpush.msra.mxu0 0.0
    %156 = vmatpush.msra.mxu0 0.0
    %157 = vmatpush.msra.mxu0 %v131
    %158 = vmatmul.f32.gmra.mxu0 %v140
    %v159 = vpop.f32.mrf.mxu0
    %v160 = vadd.f32 %v136, %v159
    %161 = vdwg.mxu0
    %162 = vmatpush.msra.mxu0 0.0
    %163 = vmatpush.msra.mxu0 0.0
    %164 = vmatpush.msra.mxu0 0.0
    %165 = vmatpush.msra.mxu0 0.0
    %166 = vmatpush.msra.mxu0 0.0
    %167 = vmatpush.msra.mxu0 0.0
    %168 = vmatpush.msra.mxu0 0.0
    %169 = vmatpush.msra.mxu0 0.0
    %170 = vmatpush.msra.mxu0 0.0
    %171 = vmatpush.msra.mxu0 0.0
    %172 = vmatpush.msra.mxu0 0.0
    %173 = vmatpush.msra.mxu0 0.0
    %174 = vmatpush.msra.mxu0 0.0
    %175 = vmatpush.msra.mxu0 0.0
    %176 = vmatpush.msra.mxu0 0.0
    %177 = vmatpush.msra.mxu0 %v132
    %178 = vmatmul.f32.gmra.mxu0 %v140
    %v179 = vpop.f32.mrf.mxu0
    %v180 = vadd.f32 %v136, %v179
    %181 = vdwg.mxu0
    %182 = vmatpush.msra.mxu0 0.0
    %183 = vmatpush.msra.mxu0 0.0
    %184 = vmatpush.msra.mxu0 0.0
    %185 = vmatpush.msra.mxu0 0.0
    %186 = vmatpush.msra.mxu0 0.0
    %187 = vmatpush.msra.mxu0 0.0
    %188 = vmatpush.msra.mxu0 0.0
    %189 = vmatpush.msra.mxu0 0.0
    %190 = vmatpush.msra.mxu0 0.0
    %191 = vmatpush.msra.mxu0 0.0
    %192 = vmatpush.msra.mxu0 0.0
    %193 = vmatpush.msra.mxu0 0.0
    %194 = vmatpush.msra.mxu0 0.0
    %195 = vmatpush.msra.mxu0 0.0
    %196 = vmatpush.msra.mxu0 0.0
    %197 = vmatpush.msra.mxu0 %v133
    %198 = vmatmul.f32.gmra.mxu0 %v140
    %v199 = vpop.f32.mrf.mxu0
    %v200 = vadd.f32 %v136, %v199
    %201 = vdwg.mxu0
    %v202 = vtanh.pop %v160
    %v203 = vtanh.pop %v180
    %v204 = vtanh.pop %v200
    %205 = vset.pattern.permute.xlu0 28
    %206 = vperm.xlu0 %205, %v41
    %v207 = vpop.permute.xlu0 %206
    %209 = vrot.lane.b32.xlu0 %v41, 112
    %v210 = vpop.permute.xlu0 %209
    %v211 = vsel %vm68, %v210, 0
    %213 = vmatpush.msra.mxu0 0.0
    %214 = vmatpush.msra.mxu0 0.0
    %215 = vmatpush.msra.mxu0 0.0
    %216 = vmatpush.msra.mxu0 0.0
    %217 = vmatpush.msra.mxu0 0.0
    %218 = vmatpush.msra.mxu0 0.0
    %219 = vmatpush.msra.mxu0 0.0
    %220 = vmatpush.msra.mxu0 0.0
    %221 = vmatpush.msra.mxu0 0.0
    %222 = vmatpush.msra.mxu0 0.0
    %223 = vmatpush.msra.mxu0 0.0
    %224 = vmatpush.msra.mxu0 0.0
    %225 = vmatpush.msra.mxu0 0.0
    %226 = vmatpush.msra.mxu0 0.0
    %227 = vmatpush.msra.mxu0 0.0
    %228 = vmatpush.msra.mxu0 %v202
    %229 = vmatmul.f32.gmra.mxu0 %v211
    %v230 = vpop.f32.mrf.mxu0
    %v231 = vadd.f32 %v207, %v230
    %232 = vdwg.mxu0
    %233 = vmatpush.msra.mxu0 0.0
    %234 = vmatpush.msra.mxu0 0.0
    %235 = vmatpush.msra.mxu0 0.0
    %236 = vmatpush.msra.mxu0 0.0
    %237 = vmatpush.msra.mxu0 0.0
    %238 = vmatpush.msra.mxu0 0.0
    %239 = vmatpush.msra.mxu0 0.0
    %240 = vmatpush.msra.mxu0 0.0
    %241 = vmatpush.msra.mxu0 0.0
    %242 = vmatpush.msra.mxu0 0.0
    %243 = vmatpush.msra.mxu0 0.0
    %244 = vmatpush.msra.mxu0 0.0
    %245 = vmatpush.msra.mxu0 0.0
    %246 = vmatpush.msra.mxu0 0.0
    %247 = vmatpush.msra.mxu0 0.0
    %248 = vmatpush.msra.mxu0 %v203
    %249 = vmatmul.f32.gmra.mxu0 %v211
    %v250 = vpop.f32.mrf.mxu0
    %v251 = vadd.f32 %v207, %v250
    %252 = vdwg.mxu0
    %253 = vmatpush.msra.mxu0 0.0
    %254 = vmatpush.msra.mxu0 0.0
    %255 = vmatpush.msra.mxu0 0.0
    %256 = vmatpush.msra.mxu0 0.0
    %257 = vmatpush.msra.mxu0 0.0
    %258 = vmatpush.msra.mxu0 0.0
    %259 = vmatpush.msra.mxu0 0.0
    %260 = vmatpush.msra.mxu0 0.0
    %261 = vmatpush.msra.mxu0 0.0
    %262 = vmatpush.msra.mxu0 0.0
    %263 = vmatpush.msra.mxu0 0.0
    %264 = vmatpush.msra.mxu0 0.0
    %265 = vmatpush.msra.mxu0 0.0
    %266 = vmatpush.msra.mxu0 0.0
    %267 = vmatpush.msra.mxu0 0.0
    %268 = vmatpush.msra.mxu0 %v204
    %269 = vmatmul.f32.gmra.mxu0 %v211
    %v270 = vpop.f32.mrf.mxu0
    %v271 = vadd.f32 %v207, %v270
    %272 = vdwg.mxu0
    %v273 = vtanh.pop %v231
    %v274 = vtanh.pop %v251
    %v275 = vtanh.pop %v271
    %v276 = vld [vmem:[#allocation2] sm:$0x1]
    %277 = vset.pattern.permute.xlu0 29
    %278 = vperm.xlu0 %277, %v41
    %v279 = vpop.permute.xlu0 %278
    %v281 = vmul.f32 %v279, %v273
    %v282 = vmul.f32 %v279, %v274
    %v283 = vmul.f32 %v279, %v275
    %v284 = vrot.slane %v281, 4
    %v285 = vadd.f32 %v281, %v284
    %v286 = vrot.slane %v285, 2
    %v287 = vadd.f32 %v285, %v286
    %v288 = vrot.slane %v287, 1
    %v289 = vadd.f32 %v287, %v288
    %v290 = vrot.slane %v282, 4
    %v291 = vadd.f32 %v282, %v290
    %v292 = vrot.slane %v291, 2
    %v293 = vadd.f32 %v291, %v292
    %v294 = vrot.slane %v293, 1
    %v295 = vadd.f32 %v293, %v294
    %v296 = vrot.slane %v283, 4
    %v297 = vadd.f32 %v283, %v296
    %v298 = vrot.slane %v297, 2
    %v299 = vadd.f32 %v297, %v298
    %v300 = vrot.slane %v299, 1
    %v301 = vadd.f32 %v299, %v300
    %303 = vset.pattern.permute.xlu0 30
    %304 = vperm.xlu0 %303, %v276
    %v305 = vpop.permute.xlu0 %304
    %v307 = vadd.f32 %v289, %v305
    %v308 = vadd.f32 %v295, %v305
    %v309 = vadd.f32 %v301, %v305
    %v313 = vrot.slane %v308, 7
    %v314 = vrot.slane %v309, 6
    %vm315 = vcmask 1040384
    %v316 = vsel %vm315, %v307, %v313
    %vm317 = vcmask 1041408
    %v318 = vsel %vm317, %v316, %v314
    %v320 = vlaneseq
    %vm321 = vcmp.ge.s32.totalorder %v320, 0
    %vm322 = vcmp.lt.s32.totalorder %v320, 384
    %vm323 = vmand %vm321, %vm322
    %324 = vst.msk [vmem:[#allocation7] sm:$0x7] %vm323, %v318
    // Predicated region
    $region18: #{tpu_custom_call.1} parent=1 // pred_check
      _
    $region19: #{tpu_custom_call.1} parent=1 // pred_check_branch
      %326 = sbr.rel (0) target = $region21
    $region20: #{tpu_custom_call.1} parent=1 // pred_region
      %328 = vsyncadd [#allocation4], 0
      %s330 = sshll.u32 [#allocation7], 4
      %s331 = int_to_ptr.vmem [resolvable:$true] %s330
      %s332 = sshll.u32 %s2, 4
      %s333 = int_to_ptr.hbm [resolvable:$true] %s332
      %335 = dma.vmem_to_hbm [thread:$0]  %s331, 48, %s333, [#allocation4]
    $region21: #{tpu_custom_call.1} parent=1 // pred_fallthru
      _
    // Predicated region
    $region22: #{tpu_custom_call.1} parent=1 // pred_check
      _
    $region23: #{tpu_custom_call.1} parent=1 // pred_check_branch
      %337 = sbr.rel (0) target = $region25
    $region24: #{tpu_custom_call.1} parent=1 // pred_region
      %339 = dma.done [#allocation4], 48
    $region25: #{tpu_custom_call.1} parent=1 // pred_fallthru
      _
    %340 = vsyncpa [#allocation3], 1
    %341 = vsyncpa [#allocation6], 1
    %342 = vsyncpa [#allocation4], 1

</llo_original>
